<compile_context>
chip_gen: v5e
topology: v5e:2x2
jax: 0.10.0
libtpu: 0.0.40
codegen_flags: <defaults>
</compile_context>

<pallas_src>
import jax
import jax.numpy as jnp
from jax.experimental import pallas as pl
from jax.experimental.pallas import tpu as pltpu


# ---------------- model hyper-params (small, consistent with forward) -------
VOCAB = 50
EMBED_DIM = 32
POS_DIM = 8
SENT_LEN = 8          # L
CLASS_NUM = 4
KERNEL_NUM = 16       # Knum
KERNEL_SIZES = (3, 5)
BATCH = 2

D_FEAT = EMBED_DIM + 2 * POS_DIM          # 48 per-token features fed to convs
N_FEAT = len(KERNEL_SIZES) * KERNEL_NUM   # 32 = fc input width / conv channels

KMAX = max(KERNEL_SIZES)                  # 5
PAD_MAX = (KMAX - 1) // 2                 # 2 (pad once with the largest pad)
SEQ_PAD = SENT_LEN + 2 * PAD_MAX          # 12 padded sequence positions
D_PAD = 64                                # 48 feats + 1 bias lane + 15 zeros
BIAS_LANE = D_FEAT                        # lane carrying 1.0 on real tokens
OUT_PAD = 128                             # lane-dense fc output
MAX_BT = 256                              # max batch tile (multiple of 16)


def _round_up(n, m):
    return ((n + m - 1) // m) * m


# ---------------------------- Pallas kernel ---------------------------------
def _crcnn_kernel(x_ref, wconv_ref, wfc_ref, bfc_ref, out_ref):
    """Fused conv (shifted matmuls) + ReLU + max-pool + fc for one batch tile.

    x_ref    : [SEQ_PAD*BT, 64]  bf16  l-major padded activations
                                       (row = l_pad*BT + b; lane 48 == 1.0 on
                                        real token rows, conv bias rides there)
    wconv_ref: [KMAX*64, 32]     bf16  per-shift packed conv weights + bias
    wfc_ref  : [32, 128]         f32   fc weight, lane-padded 4 -> 128
    bfc_ref  : [1, 128]          f32   fc bias, lane-padded
    out_ref  : [BT, 128]         f32   lane-dense padded logits
    """
    bt = out_ref.shape[0]

    # Convolution: KMAX shifted 2-D MXU matmuls, f32 accumulation.
    # Slice offsets are multiples of BT (>=16) -> sublane-aligned, no copies.
    acc = None
    for k in range(KMAX):
        lhs = x_ref[k * bt:(k + SENT_LEN) * bt, :]          # [L*BT, 64] bf16
        wk = wconv_ref[k * D_PAD:(k + 1) * D_PAD, :]        # [64, 32]  bf16
        part = jax.lax.dot_general(
            lhs, wk, (((1,), (0,)), ((), ())),
            preferred_element_type=jnp.float32)             # [L*BT, 32] f32
        acc = part if acc is None else acc + part

    h = jnp.maximum(acc, 0.0)                               # bias folded; ReLU

    # Max-pool over the sequence: rows are l-major, so position l of every
    # batch element is the contiguous slab h[l*BT:(l+1)*BT].  Pure VPU maxima.
    feat = h[0:bt, :]
    for l in range(1, SENT_LEN):
        feat = jnp.maximum(feat, h[l * bt:(l + 1) * bt, :])  # [BT, 32] f32

    # fc (tiny, kept f32) + bias; lane-dense 128-wide store.
    out_ref[...] = (jnp.dot(feat, wfc_ref[...],
                            preferred_element_type=jnp.float32)
                    + bfc_ref[...])                          # [BT, 128]


# --------------------------- weight packing ----------------------------------
def _pack_conv_weights(params):
    """Pack conv weights of both kernel sizes into one [KMAX*64, 32] bf16 matrix.

    Row block k*64..k*64+47 holds the weights multiplying padded window offset
    k; the K=3 kernel occupies offsets 1..3, K=5 occupies 0..4.  The packed
    conv bias sits at row PAD_MAX*64 + 48 (the 'ones' lane of the centre
    shift, which always reads a real token row).
    """
    w = jnp.zeros((KMAX * D_PAD, N_FEAT), jnp.float32)
    for i, K in enumerate(KERNEL_SIZES):
        wi = params["conv_w"][i].astype(jnp.float32)         # [Knum, K, D]
        off = PAD_MAX - (K - 1) // 2
        for k in range(K):
            r0 = (off + k) * D_PAD
            w = w.at[r0:r0 + D_FEAT,
                     i * KERNEL_NUM:(i + 1) * KERNEL_NUM].set(wi[:, k, :].T)
    b_all = jnp.concatenate(
        [b.astype(jnp.float32) for b in params["conv_b"]])   # [32]
    w = w.at[PAD_MAX * D_PAD + BIAS_LANE, :].set(b_all)
    return w.astype(jnp.bfloat16)


def _pack_fc(params):
    w_fc = jnp.pad(params["fc_w"].astype(jnp.float32),
                   ((0, 0), (0, OUT_PAD - CLASS_NUM)))       # [32, 128]
    b_fc = jnp.pad(params["fc_b"].astype(jnp.float32),
                   (0, OUT_PAD - CLASS_NUM)).reshape(1, OUT_PAD)
    return w_fc, b_fc


# ------------------------------ forward --------------------------------------
def crcnn_forward(x_ids, pos_ids, params):
    """Embedding gathers (JAX glue, l-major) + fused Pallas hot path."""
    B, L = x_ids.shape

    # Embedding lookups, gathered directly in l-major [L, B, ...] order.
    x = params["embed"][x_ids.T]                                     # [L, B, E]
    # dropout1: identity in eval mode
    pos = (pos_ids + SENT_LEN - 1).reshape(B, L, 2).transpose(1, 0, 2)
    p = params["pos_embed"][pos].reshape(L, B, 2 * POS_DIM)          # [L, B, 2P]
    xc = jnp.concatenate([x, p], axis=2).astype(jnp.float32)         # [L, B, 48]

    # Append the bias 'ones' lane, zero-pad lanes 49..63, cast to bf16.
    ones = jnp.ones((L, B, 1), jnp.float32)
    zpad = jnp.zeros((L, B, D_PAD - D_FEAT - 1), jnp.float32)
    x64 = jnp.concatenate([xc, ones, zpad], axis=2).astype(jnp.bfloat16)

    # Adaptive batch tile (multiple of 16 for bf16 sublane tiling).
    bt = min(MAX_BT, _round_up(B, 16))
    b_pad = _round_up(B, bt)
    nt = b_pad // bt

    # Pad sequence with the max conv pad and the batch to a whole tile, then
    # lay the tiles out as [nt, SEQ_PAD*bt, 64] so each grid step gets one
    # compact 2-D slab (the 2-D flatten happens here, not in the kernel).
    x64 = jnp.pad(x64, ((PAD_MAX, PAD_MAX), (0, b_pad - B), (0, 0)))
    x_tiles = (x64.reshape(SEQ_PAD, nt, bt, D_PAD)
                  .transpose(1, 0, 2, 3)
                  .reshape(nt, SEQ_PAD * bt, D_PAD))

    w_conv = _pack_conv_weights(params)
    w_fc, b_fc = _pack_fc(params)

    # dropout2: identity in eval mode
    out = pl.pallas_call(
        _crcnn_kernel,
        out_shape=jax.ShapeDtypeStruct((b_pad, OUT_PAD), jnp.float32),
        grid=(nt,),
        in_specs=[
            pl.BlockSpec((None, SEQ_PAD * bt, D_PAD), lambda i: (i, 0, 0)),
            pl.BlockSpec((KMAX * D_PAD, N_FEAT), lambda i: (0, 0)),
            pl.BlockSpec((N_FEAT, OUT_PAD), lambda i: (0, 0)),
            pl.BlockSpec((1, OUT_PAD), lambda i: (0, 0)),
        ],
        out_specs=pl.BlockSpec((bt, OUT_PAD), lambda i: (i, 0)),
        compiler_params=pltpu.CompilerParams(
            dimension_semantics=("parallel",),
            vmem_limit_bytes=32 * 1024 * 1024),
    )(x_tiles, w_conv, w_fc, b_fc)

    return out[:B, :CLASS_NUM]


# ------------------------- pure-JAX f32 reference ----------------------------
def crcnn_reference(x_ids, pos_ids, params):
    B, L = x_ids.shape
    x = params["embed"][x_ids]
    p = params["pos_embed"][pos_ids + SENT_LEN - 1].reshape(B, L, 2 * POS_DIM)
    xc = jnp.concatenate([x, p], axis=2)

    feats = []
    for i, K in enumerate(KERNEL_SIZES):
        pad = (K - 1) // 2
        xpad = jnp.pad(xc, ((0, 0), (pad, pad), (0, 0)))
        L_out = L + 2 * pad - K + 1
        w = params["conv_w"][i]       # [Knum, K, D]
        b = params["conv_b"][i]
        outs = []
        for t in range(L_out):
            win = xpad[:, t:t + K, :]                        # [B, K, D]
            outs.append(jnp.einsum("bkd,okd->bo", win, w) + b)
        conv = jnp.maximum(jnp.stack(outs, axis=2), 0.0)     # [B, Knum, L_out]
        feats.append(jnp.max(conv, axis=2))
    feat = jnp.concatenate(feats, axis=1)
    return feat @ params["fc_w"] + params["fc_b"]


# ------------------------------- driver --------------------------------------
def init_params(key):
    ks = jax.random.split(key, 4 + 2 * len(KERNEL_SIZES))
    params = {
        "embed": 0.1 * jax.random.normal(ks[0], (VOCAB, EMBED_DIM), jnp.float32),
        "pos_embed": 0.1 * jax.random.normal(ks[1], (2 * SENT_LEN, POS_DIM),
                                             jnp.float32),
        "fc_w": 0.1 * jax.random.normal(ks[2], (N_FEAT, CLASS_NUM), jnp.float32),
        "fc_b": 0.1 * jax.random.normal(ks[3], (CLASS_NUM,), jnp.float32),
        "conv_w": [],
        "conv_b": [],
    }
    for i, K in enumerate(KERNEL_SIZES):
        params["conv_w"].append(
            0.1 * jax.random.normal(ks[4 + 2 * i], (KERNEL_NUM, K, D_FEAT),
                                    jnp.float32))
        params["conv_b"].append(
            0.1 * jax.random.normal(ks[5 + 2 * i], (KERNEL_NUM,), jnp.float32))
    return params


if __name__ == "__main__":
    key = jax.random.PRNGKey(0)
    kp, kx, kpos = jax.random.split(key, 3)
    params = init_params(kp)

    x_ids = jax.random.randint(kx, (BATCH, SENT_LEN), 0, VOCAB, dtype=jnp.int32)
    # relative positions in [-(SENT_LEN-1), SENT_LEN]; shifted in forward
    pos_ids = jax.random.randint(kpos, (BATCH, 2 * SENT_LEN),
                                 -(SENT_LEN - 1), SENT_LEN + 1, dtype=jnp.int32)

    logits = crcnn_forward(x_ids, pos_ids, params)
    jax.block_until_ready(logits)

    ref = crcnn_reference(x_ids, pos_ids, params)
    assert logits.shape == (BATCH, CLASS_NUM)
    # Conv MXU operands are bf16 (f32 accumulation) -> relaxed tolerance.
    assert jnp.allclose(logits, ref, atol=2e-2, rtol=2e-2), (logits, ref)

    print("KERNEL_OK")
</pallas_src>

<mosaic_0001>
module attributes {stable_mosaic.version = 11 : i64} {
  func.func @_crcnn_kernel(%arg0: i32, %arg1: memref<1x192x64xbf16, #tpu.memory_space<vmem>>, %arg2: memref<320x32xbf16, #tpu.memory_space<vmem>>, %arg3: memref<32x128xf32, #tpu.memory_space<vmem>>, %arg4: memref<1x128xf32, #tpu.memory_space<vmem>>, %arg5: memref<16x128xf32, #tpu.memory_space<vmem>>) attributes {dimension_semantics = [#tpu.dimension_semantics<parallel>], iteration_bounds = array<i64: 1>, scalar_prefetch = 0 : i64, scratch_operands = 0 : i64, tpu.core_type = #tpu.core_type<tc>, window_params = [{transform_indices = @transform_0, window_bounds = array<i64: 1, 192, 64>}, {pipeline_mode = #tpu.pipeline_mode<synchronous>, transform_indices = @transform_1, window_bounds = array<i64: 320, 32>}, {pipeline_mode = #tpu.pipeline_mode<synchronous>, transform_indices = @transform_2, window_bounds = array<i64: 32, 128>}, {pipeline_mode = #tpu.pipeline_mode<synchronous>, transform_indices = @transform_3, window_bounds = array<i64: 1, 128>}, {transform_indices = @transform_4, window_bounds = array<i64: 16, 128>}]} {
    %c0 = arith.constant 0 : index
    %c0_0 = arith.constant 0 : index
    %c0_1 = arith.constant 0 : index
    %0 = vector.load %arg1[%c0, %c0_0, %c0_1] : memref<1x192x64xbf16, #tpu.memory_space<vmem>>, vector<1x128x64xbf16>
    %1 = vector.shape_cast %0 : vector<1x128x64xbf16> to vector<128x64xbf16>
    %c0_2 = arith.constant 0 : index
    %c0_3 = arith.constant 0 : index
    %2 = vector.load %arg2[%c0_2, %c0_3] : memref<320x32xbf16, #tpu.memory_space<vmem>>, vector<64x32xbf16>
    %cst = arith.constant dense<0.000000e+00> : vector<128x32xf32>
    %3 = tpu.matmul %1, %2, %cst {dimension_numbers = #tpu.dot_dimension_numbers<[1], [0], [0], [1], [0, 0, 1, 1], [], []>} : vector<128x64xbf16>, vector<64x32xbf16>, vector<128x32xf32> -> vector<128x32xf32>
    %c0_4 = arith.constant 0 : index
    %c16 = arith.constant 16 : index
    %c0_5 = arith.constant 0 : index
    %4 = vector.load %arg1[%c0_4, %c16, %c0_5] : memref<1x192x64xbf16, #tpu.memory_space<vmem>>, vector<1x128x64xbf16>
    %5 = vector.shape_cast %4 : vector<1x128x64xbf16> to vector<128x64xbf16>
    %c64 = arith.constant 64 : index
    %c0_6 = arith.constant 0 : index
    %6 = vector.load %arg2[%c64, %c0_6] : memref<320x32xbf16, #tpu.memory_space<vmem>>, vector<64x32xbf16>
    %cst_7 = arith.constant dense<0.000000e+00> : vector<128x32xf32>
    %7 = tpu.matmul %5, %6, %cst_7 {dimension_numbers = #tpu.dot_dimension_numbers<[1], [0], [0], [1], [0, 0, 1, 1], [], []>} : vector<128x64xbf16>, vector<64x32xbf16>, vector<128x32xf32> -> vector<128x32xf32>
    %8 = arith.addf %3, %7 : vector<128x32xf32>
    %c0_8 = arith.constant 0 : index
    %c32 = arith.constant 32 : index
    %c0_9 = arith.constant 0 : index
    %9 = vector.load %arg1[%c0_8, %c32, %c0_9] : memref<1x192x64xbf16, #tpu.memory_space<vmem>>, vector<1x128x64xbf16>
    %10 = vector.shape_cast %9 : vector<1x128x64xbf16> to vector<128x64xbf16>
    %c128 = arith.constant 128 : index
    %c0_10 = arith.constant 0 : index
    %11 = vector.load %arg2[%c128, %c0_10] : memref<320x32xbf16, #tpu.memory_space<vmem>>, vector<64x32xbf16>
    %cst_11 = arith.constant dense<0.000000e+00> : vector<128x32xf32>
    %12 = tpu.matmul %10, %11, %cst_11 {dimension_numbers = #tpu.dot_dimension_numbers<[1], [0], [0], [1], [0, 0, 1, 1], [], []>} : vector<128x64xbf16>, vector<64x32xbf16>, vector<128x32xf32> -> vector<128x32xf32>
    %13 = arith.addf %8, %12 : vector<128x32xf32>
    %c0_12 = arith.constant 0 : index
    %c48 = arith.constant 48 : index
    %c0_13 = arith.constant 0 : index
    %14 = vector.load %arg1[%c0_12, %c48, %c0_13] : memref<1x192x64xbf16, #tpu.memory_space<vmem>>, vector<1x128x64xbf16>
    %15 = vector.shape_cast %14 : vector<1x128x64xbf16> to vector<128x64xbf16>
    %c192 = arith.constant 192 : index
    %c0_14 = arith.constant 0 : index
    %16 = vector.load %arg2[%c192, %c0_14] : memref<320x32xbf16, #tpu.memory_space<vmem>>, vector<64x32xbf16>
    %cst_15 = arith.constant dense<0.000000e+00> : vector<128x32xf32>
    %17 = tpu.matmul %15, %16, %cst_15 {dimension_numbers = #tpu.dot_dimension_numbers<[1], [0], [0], [1], [0, 0, 1, 1], [], []>} : vector<128x64xbf16>, vector<64x32xbf16>, vector<128x32xf32> -> vector<128x32xf32>
    %18 = arith.addf %13, %17 : vector<128x32xf32>
    %c0_16 = arith.constant 0 : index
    %c64_17 = arith.constant 64 : index
    %c0_18 = arith.constant 0 : index
    %19 = vector.load %arg1[%c0_16, %c64_17, %c0_18] : memref<1x192x64xbf16, #tpu.memory_space<vmem>>, vector<1x128x64xbf16>
    %20 = vector.shape_cast %19 : vector<1x128x64xbf16> to vector<128x64xbf16>
    %c256 = arith.constant 256 : index
    %c0_19 = arith.constant 0 : index
    %21 = vector.load %arg2[%c256, %c0_19] : memref<320x32xbf16, #tpu.memory_space<vmem>>, vector<64x32xbf16>
    %cst_20 = arith.constant dense<0.000000e+00> : vector<128x32xf32>
    %22 = tpu.matmul %20, %21, %cst_20 {dimension_numbers = #tpu.dot_dimension_numbers<[1], [0], [0], [1], [0, 0, 1, 1], [], []>} : vector<128x64xbf16>, vector<64x32xbf16>, vector<128x32xf32> -> vector<128x32xf32>
    %23 = arith.addf %18, %22 : vector<128x32xf32>
    %cst_21 = arith.constant 0.000000e+00 : f32
    %24 = vector.broadcast %cst_21 : f32 to vector<128x32xf32>
    %25 = arith.maximumf %23, %24 : vector<128x32xf32>
    %26 = vector.extract_strided_slice %25 {offsets = [0, 0], sizes = [16, 32], strides = [1, 1]} : vector<128x32xf32> to vector<16x32xf32>
    %27 = vector.extract_strided_slice %25 {offsets = [16, 0], sizes = [16, 32], strides = [1, 1]} : vector<128x32xf32> to vector<16x32xf32>
    %28 = arith.maximumf %26, %27 : vector<16x32xf32>
    %29 = vector.extract_strided_slice %25 {offsets = [32, 0], sizes = [16, 32], strides = [1, 1]} : vector<128x32xf32> to vector<16x32xf32>
    %30 = arith.maximumf %28, %29 : vector<16x32xf32>
    %31 = vector.extract_strided_slice %25 {offsets = [48, 0], sizes = [16, 32], strides = [1, 1]} : vector<128x32xf32> to vector<16x32xf32>
    %32 = arith.maximumf %30, %31 : vector<16x32xf32>
    %33 = vector.extract_strided_slice %25 {offsets = [64, 0], sizes = [16, 32], strides = [1, 1]} : vector<128x32xf32> to vector<16x32xf32>
    %34 = arith.maximumf %32, %33 : vector<16x32xf32>
    %35 = vector.extract_strided_slice %25 {offsets = [80, 0], sizes = [16, 32], strides = [1, 1]} : vector<128x32xf32> to vector<16x32xf32>
    %36 = arith.maximumf %34, %35 : vector<16x32xf32>
    %37 = vector.extract_strided_slice %25 {offsets = [96, 0], sizes = [16, 32], strides = [1, 1]} : vector<128x32xf32> to vector<16x32xf32>
    %38 = arith.maximumf %36, %37 : vector<16x32xf32>
    %39 = vector.extract_strided_slice %25 {offsets = [112, 0], sizes = [16, 32], strides = [1, 1]} : vector<128x32xf32> to vector<16x32xf32>
    %40 = arith.maximumf %38, %39 : vector<16x32xf32>
    %c0_22 = arith.constant 0 : index
    %c0_23 = arith.constant 0 : index
    %41 = vector.load %arg3[%c0_22, %c0_23] : memref<32x128xf32, #tpu.memory_space<vmem>>, vector<32x128xf32>
    %cst_24 = arith.constant dense<0.000000e+00> : vector<16x128xf32>
    %42 = tpu.matmul %40, %41, %cst_24 {dimension_numbers = #tpu.dot_dimension_numbers<[1], [0], [0], [1], [0, 0, 1, 1], [], []>} : vector<16x32xf32>, vector<32x128xf32>, vector<16x128xf32> -> vector<16x128xf32>
    %c0_25 = arith.constant 0 : index
    %c0_26 = arith.constant 0 : index
    %43 = vector.load %arg4[%c0_25, %c0_26] : memref<1x128xf32, #tpu.memory_space<vmem>>, vector<1x128xf32>
    %44 = vector.broadcast %43 : vector<1x128xf32> to vector<16x128xf32>
    %45 = arith.addf %42, %44 : vector<16x128xf32>
    %c0_27 = arith.constant 0 : index
    %c0_28 = arith.constant 0 : index
    %46 = vector.load %arg5[%c0_27, %c0_28] : memref<16x128xf32, #tpu.memory_space<vmem>>, vector<16x128xf32>
    tpu.vector_store %arg5[%c0_27, %c0_28], %45 {strides = array<i32>} : memref<16x128xf32, #tpu.memory_space<vmem>>, vector<16x128xf32>,
    return
  }
  func.func @transform_0(%arg0: i32) -> (i32, i32, i32) {
    %c0_i32 = arith.constant 0 : i32
    %c0_i32_0 = arith.constant 0 : i32
    %c0_i32_1 = arith.constant 0 : i32
    return %arg0, %c0_i32, %c0_i32_0 : i32, i32, i32
  }
  func.func @transform_1(%arg0: i32) -> (i32, i32) {
    %c0_i32 = arith.constant 0 : i32
    %c0_i32_0 = arith.constant 0 : i32
    %c0_i32_1 = arith.constant 0 : i32
    return %c0_i32, %c0_i32_0 : i32, i32
  }
  func.func @transform_2(%arg0: i32) -> (i32, i32) {
    %c0_i32 = arith.constant 0 : i32
    %c0_i32_0 = arith.constant 0 : i32
    %c0_i32_1 = arith.constant 0 : i32
    return %c0_i32, %c0_i32_0 : i32, i32
  }
  func.func @transform_3(%arg0: i32) -> (i32, i32) {
    %c0_i32 = arith.constant 0 : i32
    %c0_i32_0 = arith.constant 0 : i32
    %c0_i32_1 = arith.constant 0 : i32
    return %c0_i32, %c0_i32_0 : i32, i32
  }
  func.func @transform_4(%arg0: i32) -> (i32, i32) {
    %c0_i32 = arith.constant 0 : i32
    %c0_i32_0 = arith.constant 0 : i32
    return %arg0, %c0_i32 : i32, i32
  }
}

</mosaic_0001>

<llo_original>
// kernel: tpu_custom_call.1
$region0: #{tpu_custom_call.1}
  #allocation0 [shape = 'u32[]', space=smem, size = 0x4, offset = 0x4, fixed_abs, tag = 'smem constant byte address 0x4 - core index']
  #allocation1 [shape = 'u32[72,128]{1,0:T(1,128)}', space=vmem, size = 0x9000, scoped, tag = 'internal scratch']
  %s0 = inlined_call_operand.vmem [shape: bf16[1,192,64], index: 0, kind: input, shape index: {}]
  %s1 = inlined_call_operand.vmem [shape: bf16[320,32], index: 1, kind: input, shape index: {}]
  %s2 = inlined_call_operand.vmem [shape: f32[32,128], index: 2, kind: input, shape index: {}]
  %s3 = inlined_call_operand.vmem [shape: f32[1,128], index: 3, kind: input, shape index: {}]
  %s4 = inlined_call_operand.hbm [shape: f32[16,128], index: 4, kind: output, shape index: {}]
  %s5 = sld [smem:[#allocation0]]
  $region26: #{tpu_custom_call.1} parent=0
    _
  %s7 = ssub.s32 1, %s5
  %s8 = scalar_select 0, %s7, %s5
  $region1: #{tpu_custom_call.1} parent=0
    #allocation2 [shape = 'u8[8192]{0}', space=vmem, size = 0x2000, scoped, tag = 'output window, operand 0, single buffered']
    #allocation3 [shape = 's32[1]{0}', space=sflag, size = 0x4, scoped, tag = 'scoped memory for tpu_custom_call.1']
    %9 = vsyncpa [#allocation3], 0
    // Predicated region
    $region2: #{tpu_custom_call.1} parent=1 // pred_check
      _
    $region3: #{tpu_custom_call.1} parent=1 // pred_check_branch
      %11 = sbr.rel (0) target = $region5
    $region4: #{tpu_custom_call.1} parent=1 // pred_region
      _
    $region5: #{tpu_custom_call.1} parent=1 // pred_fallthru
      _
    // Predicated region
    $region6: #{tpu_custom_call.1} parent=1 // pred_check
      _
    $region7: #{tpu_custom_call.1} parent=1 // pred_check_branch
      %13 = sbr.rel (0) target = $region9
    $region8: #{tpu_custom_call.1} parent=1 // pred_region
      _
    $region9: #{tpu_custom_call.1} parent=1 // pred_fallthru
      _
    // Predicated region
    $region10: #{tpu_custom_call.1} parent=1 // pred_check
      _
    $region11: #{tpu_custom_call.1} parent=1 // pred_check_branch
      %15 = sbr.rel (0) target = $region13
    $region12: #{tpu_custom_call.1} parent=1 // pred_region
      _
    $region13: #{tpu_custom_call.1} parent=1 // pred_fallthru
      _
    // Predicated region
    $region14: #{tpu_custom_call.1} parent=1 // pred_check
      _
    $region15: #{tpu_custom_call.1} parent=1 // pred_check_branch
      %17 = sbr.rel (0) target = $region17
    $region16: #{tpu_custom_call.1} parent=1 // pred_region
      _
    $region17: #{tpu_custom_call.1} parent=1 // pred_fallthru
      _
    %v19 = vld [vmem:[%s0] sm:$0xf]
    %v20 = vld [vmem:[%s0 + $0x4] sm:$0xf]
    %v21 = vld [vmem:[%s0 + $0x8] sm:$0xf]
    %v22 = vld [vmem:[%s0 + $0xc] sm:$0xf]
    %v23 = vld [vmem:[%s0 + $0x10] sm:$0xf]
    %v24 = vld [vmem:[%s0 + $0x14] sm:$0xf]
    %v25 = vld [vmem:[%s0 + $0x18] sm:$0xf]
    %v26 = vld [vmem:[%s0 + $0x1c] sm:$0xf]
    %v27 = vld [vmem:[%s0 + $0x20] sm:$0xf]
    %v28 = vld [vmem:[%s0 + $0x24] sm:$0xf]
    %v29 = vld [vmem:[%s0 + $0x28] sm:$0xf]
    %v30 = vld [vmem:[%s0 + $0x2c] sm:$0xf]
    %v31 = vld [vmem:[%s0 + $0x30] sm:$0xf]
    %v32 = vld [vmem:[%s0 + $0x34] sm:$0xf]
    %v33 = vld [vmem:[%s0 + $0x38] sm:$0xf]
    %v34 = vld [vmem:[%s0 + $0x3c] sm:$0xf]
    %v35 = vld [vmem:[%s1] sm:$0xf]
    %v36 = vld [vmem:[%s1 + $0x4] sm:$0xf]
    %v37 = vld [vmem:[%s1 + $0x8] sm:$0xf]
    %v38 = vld [vmem:[%s1 + $0xc] sm:$0xf]
    %v39 = vld [vmem:[%s1 + $0x10] sm:$0xf]
    %v40 = vld [vmem:[%s1 + $0x14] sm:$0xf]
    %v41 = vld [vmem:[%s1 + $0x18] sm:$0xf]
    %v42 = vld [vmem:[%s1 + $0x1c] sm:$0xf]
    %v43 = vld [vmem:[%s0 + $0x40] sm:$0xf]
    %v44 = vld [vmem:[%s0 + $0x44] sm:$0xf]
    %v45 = vld [vmem:[%s1 + $0x20] sm:$0xf]
    %v46 = vld [vmem:[%s1 + $0x24] sm:$0xf]
    %v47 = vld [vmem:[%s1 + $0x28] sm:$0xf]
    %v48 = vld [vmem:[%s1 + $0x2c] sm:$0xf]
    %v49 = vld [vmem:[%s1 + $0x30] sm:$0xf]
    %v50 = vld [vmem:[%s1 + $0x34] sm:$0xf]
    %v51 = vld [vmem:[%s1 + $0x38] sm:$0xf]
    %v52 = vld [vmem:[%s1 + $0x3c] sm:$0xf]
    %v69 = vunpack.c.l.b16 %v21
    %v70 = vunpack.c.l.b16 %v22
    %v71 = vunpack.c.l.b16 %v23
    %v72 = vunpack.c.l.b16 %v24
    %v73 = vunpack.c.l.b16 %v25
    %v74 = vunpack.c.l.b16 %v26
    %v75 = vunpack.c.l.b16 %v27
    %v76 = vunpack.c.l.b16 %v28
    %v77 = vunpack.c.l.b16 %v29
    %v78 = vunpack.c.l.b16 %v30
    %v79 = vunpack.c.l.b16 %v31
    %v80 = vunpack.c.l.b16 %v32
    %v81 = vunpack.c.l.b16 %v33
    %v82 = vunpack.c.l.b16 %v34
    %v83 = vunpack.c.l.b16 %v43
    %v84 = vunpack.c.l.b16 %v44
    %v85 = vpack.c.b16 %v70, %v69
    %v86 = vpack.c.b16 %v72, %v71
    %v87 = vpack.c.b16 %v74, %v73
    %v88 = vpack.c.b16 %v76, %v75
    %v89 = vpack.c.b16 %v78, %v77
    %v90 = vpack.c.b16 %v80, %v79
    %v91 = vpack.c.b16 %v82, %v81
    %v92 = vpack.c.b16 %v84, %v83
    %v101 = vunpack.c.l.b16 %v45
    %v102 = vunpack.c.l.b16 %v46
    %v103 = vunpack.c.l.b16 %v47
    %v104 = vunpack.c.l.b16 %v48
    %v105 = vunpack.c.l.b16 %v49
    %v106 = vunpack.c.l.b16 %v50
    %v107 = vunpack.c.l.b16 %v51
    %v108 = vunpack.c.l.b16 %v52
    %v109 = vpack.c.b16 %v102, %v101
    %v110 = vpack.c.b16 %v104, %v103
    %v111 = vpack.c.b16 %v106, %v105
    %v112 = vpack.c.b16 %v108, %v107
    %vm117 = vcmask 523264
    %v119 = vsel %vm117, %v85, 0
    %v122 = vsel %vm117, %v86, 0
    %v125 = vsel %vm117, %v87, 0
    %v128 = vsel %vm117, %v88, 0
    %v131 = vsel %vm117, %v89, 0
    %v134 = vsel %vm117, %v90, 0
    %v137 = vsel %vm117, %v91, 0
    %v140 = vsel %vm117, %v92, 0
    %142 = vmatpush.bf16.msra.mxu0 0
    %143 = vmatpush.bf16.msra.mxu0 0
    %144 = vmatpush.bf16.msra.mxu0 0
    %145 = vmatpush.bf16.msra.mxu0 0
    %146 = vmatpush.bf16.msra.mxu0 %v112
    %147 = vmatpush.bf16.msra.mxu0 %v111
    %148 = vmatpush.bf16.msra.mxu0 %v110
    %149 = vmatpush.bf16.msra.mxu0 %v109
    %150 = vmatmul.bf16.gmra.mxu0 %v119
    %v151 = vpop.f32.mrf.mxu0
    %v152 = vadd.f32 0.0, %v151
    %v153 = vpop.f32.mrf.mxu0
    %v154 = vadd.f32 0.0, %v153
    %155 = vmatmul.bf16.gmra.mxu0 %v122
    %v156 = vpop.f32.mrf.mxu0
    %v157 = vadd.f32 0.0, %v156
    %v158 = vpop.f32.mrf.mxu0
    %v159 = vadd.f32 0.0, %v158
    %160 = vmatmul.bf16.gmra.mxu0 %v125
    %v161 = vpop.f32.mrf.mxu0
    %v162 = vadd.f32 0.0, %v161
    %v163 = vpop.f32.mrf.mxu0
    %v164 = vadd.f32 0.0, %v163
    %165 = vmatmul.bf16.gmra.mxu0 %v128
    %v166 = vpop.f32.mrf.mxu0
    %v167 = vadd.f32 0.0, %v166
    %v168 = vpop.f32.mrf.mxu0
    %v169 = vadd.f32 0.0, %v168
    %170 = vmatmul.bf16.gmra.mxu0 %v131
    %v171 = vpop.f32.mrf.mxu0
    %v172 = vadd.f32 0.0, %v171
    %v173 = vpop.f32.mrf.mxu0
    %v174 = vadd.f32 0.0, %v173
    %175 = vmatmul.bf16.gmra.mxu0 %v134
    %v176 = vpop.f32.mrf.mxu0
    %v177 = vadd.f32 0.0, %v176
    %v178 = vpop.f32.mrf.mxu0
    %v179 = vadd.f32 0.0, %v178
    %180 = vmatmul.bf16.gmra.mxu0 %v137
    %v181 = vpop.f32.mrf.mxu0
    %v182 = vadd.f32 0.0, %v181
    %v183 = vpop.f32.mrf.mxu0
    %v184 = vadd.f32 0.0, %v183
    %185 = vmatmul.bf16.gmra.mxu0 %v140
    %v186 = vpop.f32.mrf.mxu0
    %v187 = vadd.f32 0.0, %v186
    %v188 = vpop.f32.mrf.mxu0
    %v189 = vadd.f32 0.0, %v188
    %190 = vdwg.mxu0
    %v193 = vunpack.c.l.b16 %v19
    %v194 = vunpack.c.l.b16 %v20
    %v195 = vpack.c.b16 %v194, %v193
    %v204 = vunpack.c.l.b16 %v35
    %v205 = vunpack.c.l.b16 %v36
    %v206 = vunpack.c.l.b16 %v37
    %v207 = vunpack.c.l.b16 %v38
    %v208 = vunpack.c.l.b16 %v39
    %v209 = vunpack.c.l.b16 %v40
    %v210 = vunpack.c.l.b16 %v41
    %v211 = vunpack.c.l.b16 %v42
    %v212 = vpack.c.b16 %v205, %v204
    %v213 = vpack.c.b16 %v207, %v206
    %v214 = vpack.c.b16 %v209, %v208
    %v215 = vpack.c.b16 %v211, %v210
    %v221 = vsel %vm117, %v195, 0
    %223 = vmatpush.bf16.msra.mxu0 0
    %224 = vmatpush.bf16.msra.mxu0 0
    %225 = vmatpush.bf16.msra.mxu0 0
    %226 = vmatpush.bf16.msra.mxu0 0
    %227 = vmatpush.bf16.msra.mxu0 %v215
    %228 = vmatpush.bf16.msra.mxu0 %v214
    %229 = vmatpush.bf16.msra.mxu0 %v213
    %230 = vmatpush.bf16.msra.mxu0 %v212
    %231 = vmatmul.bf16.gmra.mxu0 %v221
    %v232 = vpop.f32.mrf.mxu0
    %v233 = vadd.f32 %v152, %v232
    %v234 = vpop.f32.mrf.mxu0
    %v235 = vadd.f32 %v154, %v234
    %236 = vmatmul.bf16.gmra.mxu0 %v119
    %v237 = vpop.f32.mrf.mxu0
    %v238 = vadd.f32 %v157, %v237
    %v239 = vpop.f32.mrf.mxu0
    %v240 = vadd.f32 %v159, %v239
    %241 = vmatmul.bf16.gmra.mxu0 %v122
    %v242 = vpop.f32.mrf.mxu0
    %v243 = vadd.f32 %v162, %v242
    %v244 = vpop.f32.mrf.mxu0
    %v245 = vadd.f32 %v164, %v244
    %246 = vmatmul.bf16.gmra.mxu0 %v125
    %v247 = vpop.f32.mrf.mxu0
    %v248 = vadd.f32 %v167, %v247
    %v249 = vpop.f32.mrf.mxu0
    %v250 = vadd.f32 %v169, %v249
    %251 = vmatmul.bf16.gmra.mxu0 %v128
    %v252 = vpop.f32.mrf.mxu0
    %v253 = vadd.f32 %v172, %v252
    %v254 = vpop.f32.mrf.mxu0
    %v255 = vadd.f32 %v174, %v254
    %256 = vmatmul.bf16.gmra.mxu0 %v131
    %v257 = vpop.f32.mrf.mxu0
    %v258 = vadd.f32 %v177, %v257
    %v259 = vpop.f32.mrf.mxu0
    %v260 = vadd.f32 %v179, %v259
    %261 = vmatmul.bf16.gmra.mxu0 %v134
    %v262 = vpop.f32.mrf.mxu0
    %v263 = vadd.f32 %v182, %v262
    %v264 = vpop.f32.mrf.mxu0
    %v265 = vadd.f32 %v184, %v264
    %266 = vmatmul.bf16.gmra.mxu0 %v137
    %v267 = vpop.f32.mrf.mxu0
    %v268 = vadd.f32 %v187, %v267
    %v269 = vpop.f32.mrf.mxu0
    %v270 = vadd.f32 %v189, %v269
    %271 = vdwg.mxu0
    %v272 = vld [vmem:[%s0 + $0x10] sm:$0xf]
    %v273 = vld [vmem:[%s0 + $0x14] sm:$0xf]
    %v274 = vld [vmem:[%s0 + $0x18] sm:$0xf]
    %v275 = vld [vmem:[%s0 + $0x1c] sm:$0xf]
    %v276 = vld [vmem:[%s0 + $0x20] sm:$0xf]
    %v277 = vld [vmem:[%s0 + $0x24] sm:$0xf]
    %v278 = vld [vmem:[%s0 + $0x28] sm:$0xf]
    %v279 = vld [vmem:[%s0 + $0x2c] sm:$0xf]
    %v280 = vld [vmem:[%s0 + $0x30] sm:$0xf]
    %v281 = vld [vmem:[%s0 + $0x34] sm:$0xf]
    %v282 = vld [vmem:[%s0 + $0x38] sm:$0xf]
    %v283 = vld [vmem:[%s0 + $0x3c] sm:$0xf]
    %v284 = vld [vmem:[%s0 + $0x40] sm:$0xf]
    %v285 = vld [vmem:[%s0 + $0x44] sm:$0xf]
    %v286 = vld [vmem:[%s0 + $0x48] sm:$0xf]
    %v287 = vld [vmem:[%s0 + $0x4c] sm:$0xf]
    %v288 = vld [vmem:[%s1 + $0x40] sm:$0xf]
    %v289 = vld [vmem:[%s1 + $0x44] sm:$0xf]
    %v290 = vld [vmem:[%s1 + $0x48] sm:$0xf]
    %v291 = vld [vmem:[%s1 + $0x4c] sm:$0xf]
    %v292 = vld [vmem:[%s1 + $0x50] sm:$0xf]
    %v293 = vld [vmem:[%s1 + $0x54] sm:$0xf]
    %v294 = vld [vmem:[%s1 + $0x58] sm:$0xf]
    %v295 = vld [vmem:[%s1 + $0x5c] sm:$0xf]
    %v312 = vunpack.c.l.b16 %v272
    %v313 = vunpack.c.l.b16 %v273
    %v314 = vunpack.c.l.b16 %v274
    %v315 = vunpack.c.l.b16 %v275
    %v316 = vunpack.c.l.b16 %v276
    %v317 = vunpack.c.l.b16 %v277
    %v318 = vunpack.c.l.b16 %v278
    %v319 = vunpack.c.l.b16 %v279
    %v320 = vunpack.c.l.b16 %v280
    %v321 = vunpack.c.l.b16 %v281
    %v322 = vunpack.c.l.b16 %v282
    %v323 = vunpack.c.l.b16 %v283
    %v324 = vunpack.c.l.b16 %v284
    %v325 = vunpack.c.l.b16 %v285
    %v326 = vunpack.c.l.b16 %v286
    %v327 = vunpack.c.l.b16 %v287
    %v328 = vpack.c.b16 %v313, %v312
    %v329 = vpack.c.b16 %v315, %v314
    %v330 = vpack.c.b16 %v317, %v316
    %v331 = vpack.c.b16 %v319, %v318
    %v332 = vpack.c.b16 %v321, %v320
    %v333 = vpack.c.b16 %v323, %v322
    %v334 = vpack.c.b16 %v325, %v324
    %v335 = vpack.c.b16 %v327, %v326
    %v344 = vunpack.c.l.b16 %v288
    %v345 = vunpack.c.l.b16 %v289
    %v346 = vunpack.c.l.b16 %v290
    %v347 = vunpack.c.l.b16 %v291
    %v348 = vunpack.c.l.b16 %v292
    %v349 = vunpack.c.l.b16 %v293
    %v350 = vunpack.c.l.b16 %v294
    %v351 = vunpack.c.l.b16 %v295
    %v352 = vpack.c.b16 %v345, %v344
    %v353 = vpack.c.b16 %v347, %v346
    %v354 = vpack.c.b16 %v349, %v348
    %v355 = vpack.c.b16 %v351, %v350
    %v361 = vsel %vm117, %v328, 0
    %v364 = vsel %vm117, %v329, 0
    %v367 = vsel %vm117, %v330, 0
    %v370 = vsel %vm117, %v331, 0
    %v373 = vsel %vm117, %v332, 0
    %v376 = vsel %vm117, %v333, 0
    %v379 = vsel %vm117, %v334, 0
    %v382 = vsel %vm117, %v335, 0
    %384 = vmatpush.bf16.msra.mxu0 0
    %385 = vmatpush.bf16.msra.mxu0 0
    %386 = vmatpush.bf16.msra.mxu0 0
    %387 = vmatpush.bf16.msra.mxu0 0
    %388 = vmatpush.bf16.msra.mxu0 %v355
    %389 = vmatpush.bf16.msra.mxu0 %v354
    %390 = vmatpush.bf16.msra.mxu0 %v353
    %391 = vmatpush.bf16.msra.mxu0 %v352
    %392 = vmatmul.bf16.gmra.mxu0 %v361
    %v393 = vpop.f32.mrf.mxu0
    %v394 = vadd.f32 0.0, %v393
    %v395 = vpop.f32.mrf.mxu0
    %v396 = vadd.f32 0.0, %v395
    %397 = vmatmul.bf16.gmra.mxu0 %v364
    %v398 = vpop.f32.mrf.mxu0
    %v399 = vadd.f32 0.0, %v398
    %v400 = vpop.f32.mrf.mxu0
    %v401 = vadd.f32 0.0, %v400
    %402 = vmatmul.bf16.gmra.mxu0 %v367
    %v403 = vpop.f32.mrf.mxu0
    %v404 = vadd.f32 0.0, %v403
    %v405 = vpop.f32.mrf.mxu0
    %v406 = vadd.f32 0.0, %v405
    %407 = vmatmul.bf16.gmra.mxu0 %v370
    %v408 = vpop.f32.mrf.mxu0
    %v409 = vadd.f32 0.0, %v408
    %v410 = vpop.f32.mrf.mxu0
    %v411 = vadd.f32 0.0, %v410
    %412 = vmatmul.bf16.gmra.mxu0 %v373
    %v413 = vpop.f32.mrf.mxu0
    %v414 = vadd.f32 0.0, %v413
    %v415 = vpop.f32.mrf.mxu0
    %v416 = vadd.f32 0.0, %v415
    %417 = vmatmul.bf16.gmra.mxu0 %v376
    %v418 = vpop.f32.mrf.mxu0
    %v419 = vadd.f32 0.0, %v418
    %v420 = vpop.f32.mrf.mxu0
    %v421 = vadd.f32 0.0, %v420
    %422 = vmatmul.bf16.gmra.mxu0 %v379
    %v423 = vpop.f32.mrf.mxu0
    %v424 = vadd.f32 0.0, %v423
    %v425 = vpop.f32.mrf.mxu0
    %v426 = vadd.f32 0.0, %v425
    %427 = vmatmul.bf16.gmra.mxu0 %v382
    %v428 = vpop.f32.mrf.mxu0
    %v429 = vadd.f32 0.0, %v428
    %v430 = vpop.f32.mrf.mxu0
    %v431 = vadd.f32 0.0, %v430
    %432 = vdwg.mxu0
    %v433 = vadd.f32 %v233, %v394
    %v434 = vadd.f32 %v235, %v396
    %v435 = vadd.f32 %v238, %v399
    %v436 = vadd.f32 %v240, %v401
    %v437 = vadd.f32 %v243, %v404
    %v438 = vadd.f32 %v245, %v406
    %v439 = vadd.f32 %v248, %v409
    %v440 = vadd.f32 %v250, %v411
    %v441 = vadd.f32 %v253, %v414
    %v442 = vadd.f32 %v255, %v416
    %v443 = vadd.f32 %v258, %v419
    %v444 = vadd.f32 %v260, %v421
    %v445 = vadd.f32 %v263, %v424
    %v446 = vadd.f32 %v265, %v426
    %v447 = vadd.f32 %v268, %v429
    %v448 = vadd.f32 %v270, %v431
    %v449 = vld [vmem:[%s0 + $0x18] sm:$0xf]
    %v450 = vld [vmem:[%s0 + $0x1c] sm:$0xf]
    %v451 = vld [vmem:[%s0 + $0x20] sm:$0xf]
    %v452 = vld [vmem:[%s0 + $0x24] sm:$0xf]
    %v453 = vld [vmem:[%s0 + $0x28] sm:$0xf]
    %v454 = vld [vmem:[%s0 + $0x2c] sm:$0xf]
    %v455 = vld [vmem:[%s0 + $0x30] sm:$0xf]
    %v456 = vld [vmem:[%s0 + $0x34] sm:$0xf]
    %v457 = vld [vmem:[%s0 + $0x38] sm:$0xf]
    %v458 = vld [vmem:[%s0 + $0x3c] sm:$0xf]
    %v459 = vld [vmem:[%s0 + $0x40] sm:$0xf]
    %v460 = vld [vmem:[%s0 + $0x44] sm:$0xf]
    %v461 = vld [vmem:[%s0 + $0x48] sm:$0xf]
    %v462 = vld [vmem:[%s0 + $0x4c] sm:$0xf]
    %v463 = vld [vmem:[%s0 + $0x50] sm:$0xf]
    %v464 = vld [vmem:[%s0 + $0x54] sm:$0xf]
    %v465 = vld [vmem:[%s1 + $0x60] sm:$0xf]
    %v466 = vld [vmem:[%s1 + $0x64] sm:$0xf]
    %v467 = vld [vmem:[%s1 + $0x68] sm:$0xf]
    %v468 = vld [vmem:[%s1 + $0x6c] sm:$0xf]
    %v469 = vld [vmem:[%s1 + $0x70] sm:$0xf]
    %v470 = vld [vmem:[%s1 + $0x74] sm:$0xf]
    %v471 = vld [vmem:[%s1 + $0x78] sm:$0xf]
    %v472 = vld [vmem:[%s1 + $0x7c] sm:$0xf]
    %v489 = vunpack.c.l.b16 %v449
    %v490 = vunpack.c.l.b16 %v450
    %v491 = vunpack.c.l.b16 %v451
    %v492 = vunpack.c.l.b16 %v452
    %v493 = vunpack.c.l.b16 %v453
    %v494 = vunpack.c.l.b16 %v454
    %v495 = vunpack.c.l.b16 %v455
    %v496 = vunpack.c.l.b16 %v456
    %v497 = vunpack.c.l.b16 %v457
    %v498 = vunpack.c.l.b16 %v458
    %v499 = vunpack.c.l.b16 %v459
    %v500 = vunpack.c.l.b16 %v460
    %v501 = vunpack.c.l.b16 %v461
    %v502 = vunpack.c.l.b16 %v462
    %v503 = vunpack.c.l.b16 %v463
    %v504 = vunpack.c.l.b16 %v464
    %v505 = vpack.c.b16 %v490, %v489
    %v506 = vpack.c.b16 %v492, %v491
    %v507 = vpack.c.b16 %v494, %v493
    %v508 = vpack.c.b16 %v496, %v495
    %v509 = vpack.c.b16 %v498, %v497
    %v510 = vpack.c.b16 %v500, %v499
    %v511 = vpack.c.b16 %v502, %v501
    %v512 = vpack.c.b16 %v504, %v503
    %v521 = vunpack.c.l.b16 %v465
    %v522 = vunpack.c.l.b16 %v466
    %v523 = vunpack.c.l.b16 %v467
    %v524 = vunpack.c.l.b16 %v468
    %v525 = vunpack.c.l.b16 %v469
    %v526 = vunpack.c.l.b16 %v470
    %v527 = vunpack.c.l.b16 %v471
    %v528 = vunpack.c.l.b16 %v472
    %v529 = vpack.c.b16 %v522, %v521
    %v530 = vpack.c.b16 %v524, %v523
    %v531 = vpack.c.b16 %v526, %v525
    %v532 = vpack.c.b16 %v528, %v527
    %v538 = vsel %vm117, %v505, 0
    %v541 = vsel %vm117, %v506, 0
    %v544 = vsel %vm117, %v507, 0
    %v547 = vsel %vm117, %v508, 0
    %v550 = vsel %vm117, %v509, 0
    %v553 = vsel %vm117, %v510, 0
    %v556 = vsel %vm117, %v511, 0
    %v559 = vsel %vm117, %v512, 0
    %561 = vmatpush.bf16.msra.mxu0 0
    %562 = vmatpush.bf16.msra.mxu0 0
    %563 = vmatpush.bf16.msra.mxu0 0
    %564 = vmatpush.bf16.msra.mxu0 0
    %565 = vmatpush.bf16.msra.mxu0 %v532
    %566 = vmatpush.bf16.msra.mxu0 %v531
    %567 = vmatpush.bf16.msra.mxu0 %v530
    %568 = vmatpush.bf16.msra.mxu0 %v529
    %569 = vmatmul.bf16.gmra.mxu0 %v538
    %v570 = vpop.f32.mrf.mxu0
    %v571 = vadd.f32 0.0, %v570
    %v572 = vpop.f32.mrf.mxu0
    %v573 = vadd.f32 0.0, %v572
    %574 = vmatmul.bf16.gmra.mxu0 %v541
    %v575 = vpop.f32.mrf.mxu0
    %v576 = vadd.f32 0.0, %v575
    %v577 = vpop.f32.mrf.mxu0
    %v578 = vadd.f32 0.0, %v577
    %579 = vmatmul.bf16.gmra.mxu0 %v544
    %v580 = vpop.f32.mrf.mxu0
    %v581 = vadd.f32 0.0, %v580
    %v582 = vpop.f32.mrf.mxu0
    %v583 = vadd.f32 0.0, %v582
    %584 = vmatmul.bf16.gmra.mxu0 %v547
    %v585 = vpop.f32.mrf.mxu0
    %v586 = vadd.f32 0.0, %v585
    %v587 = vpop.f32.mrf.mxu0
    %v588 = vadd.f32 0.0, %v587
    %589 = vmatmul.bf16.gmra.mxu0 %v550
    %v590 = vpop.f32.mrf.mxu0
    %v591 = vadd.f32 0.0, %v590
    %v592 = vpop.f32.mrf.mxu0
    %v593 = vadd.f32 0.0, %v592
    %594 = vmatmul.bf16.gmra.mxu0 %v553
    %v595 = vpop.f32.mrf.mxu0
    %v596 = vadd.f32 0.0, %v595
    %v597 = vpop.f32.mrf.mxu0
    %v598 = vadd.f32 0.0, %v597
    %599 = vmatmul.bf16.gmra.mxu0 %v556
    %v600 = vpop.f32.mrf.mxu0
    %v601 = vadd.f32 0.0, %v600
    %v602 = vpop.f32.mrf.mxu0
    %v603 = vadd.f32 0.0, %v602
    %604 = vmatmul.bf16.gmra.mxu0 %v559
    %v605 = vpop.f32.mrf.mxu0
    %v606 = vadd.f32 0.0, %v605
    %v607 = vpop.f32.mrf.mxu0
    %v608 = vadd.f32 0.0, %v607
    %609 = vdwg.mxu0
    %v610 = vadd.f32 %v433, %v571
    %v611 = vadd.f32 %v434, %v573
    %v612 = vadd.f32 %v435, %v576
    %v613 = vadd.f32 %v436, %v578
    %v614 = vadd.f32 %v437, %v581
    %v615 = vadd.f32 %v438, %v583
    %v616 = vadd.f32 %v439, %v586
    %v617 = vadd.f32 %v440, %v588
    %v618 = vadd.f32 %v441, %v591
    %v619 = vadd.f32 %v442, %v593
    %v620 = vadd.f32 %v443, %v596
    %v621 = vadd.f32 %v444, %v598
    %v622 = vadd.f32 %v445, %v601
    %v623 = vadd.f32 %v446, %v603
    %v624 = vadd.f32 %v447, %v606
    %v625 = vadd.f32 %v448, %v608
    %v626 = vld [vmem:[%s0 + $0x20] sm:$0xf]
    %v627 = vld [vmem:[%s0 + $0x24] sm:$0xf]
    %v628 = vld [vmem:[%s0 + $0x28] sm:$0xf]
    %v629 = vld [vmem:[%s0 + $0x2c] sm:$0xf]
    %v630 = vld [vmem:[%s0 + $0x30] sm:$0xf]
    %v631 = vld [vmem:[%s0 + $0x34] sm:$0xf]
    %v632 = vld [vmem:[%s0 + $0x38] sm:$0xf]
    %v633 = vld [vmem:[%s0 + $0x3c] sm:$0xf]
    %v634 = vld [vmem:[%s0 + $0x40] sm:$0xf]
    %v635 = vld [vmem:[%s0 + $0x44] sm:$0xf]
    %v636 = vld [vmem:[%s0 + $0x48] sm:$0xf]
    %v637 = vld [vmem:[%s0 + $0x4c] sm:$0xf]
    %v638 = vld [vmem:[%s0 + $0x50] sm:$0xf]
    %v639 = vld [vmem:[%s0 + $0x54] sm:$0xf]
    %v640 = vld [vmem:[%s0 + $0x58] sm:$0xf]
    %v641 = vld [vmem:[%s0 + $0x5c] sm:$0xf]
    %v642 = vld [vmem:[%s1 + $0x80] sm:$0xf]
    %v643 = vld [vmem:[%s1 + $0x84] sm:$0xf]
    %v644 = vld [vmem:[%s1 + $0x88] sm:$0xf]
    %v645 = vld [vmem:[%s1 + $0x8c] sm:$0xf]
    %v646 = vld [vmem:[%s1 + $0x90] sm:$0xf]
    %v647 = vld [vmem:[%s1 + $0x94] sm:$0xf]
    %v648 = vld [vmem:[%s1 + $0x98] sm:$0xf]
    %v649 = vld [vmem:[%s1 + $0x9c] sm:$0xf]
    %v666 = vunpack.c.l.b16 %v626
    %v667 = vunpack.c.l.b16 %v627
    %v668 = vunpack.c.l.b16 %v628
    %v669 = vunpack.c.l.b16 %v629
    %v670 = vunpack.c.l.b16 %v630
    %v671 = vunpack.c.l.b16 %v631
    %v672 = vunpack.c.l.b16 %v632
    %v673 = vunpack.c.l.b16 %v633
    %v674 = vunpack.c.l.b16 %v634
    %v675 = vunpack.c.l.b16 %v635
    %v676 = vunpack.c.l.b16 %v636
    %v677 = vunpack.c.l.b16 %v637
    %v678 = vunpack.c.l.b16 %v638
    %v679 = vunpack.c.l.b16 %v639
    %v680 = vunpack.c.l.b16 %v640
    %v681 = vunpack.c.l.b16 %v641
    %v682 = vpack.c.b16 %v667, %v666
    %v683 = vpack.c.b16 %v669, %v668
    %v684 = vpack.c.b16 %v671, %v670
    %v685 = vpack.c.b16 %v673, %v672
    %v686 = vpack.c.b16 %v675, %v674
    %v687 = vpack.c.b16 %v677, %v676
    %v688 = vpack.c.b16 %v679, %v678
    %v689 = vpack.c.b16 %v681, %v680
    %v698 = vunpack.c.l.b16 %v642
    %v699 = vunpack.c.l.b16 %v643
    %v700 = vunpack.c.l.b16 %v644
    %v701 = vunpack.c.l.b16 %v645
    %v702 = vunpack.c.l.b16 %v646
    %v703 = vunpack.c.l.b16 %v647
    %v704 = vunpack.c.l.b16 %v648
    %v705 = vunpack.c.l.b16 %v649
    %v706 = vpack.c.b16 %v699, %v698
    %v707 = vpack.c.b16 %v701, %v700
    %v708 = vpack.c.b16 %v703, %v702
    %v709 = vpack.c.b16 %v705, %v704
    %v715 = vsel %vm117, %v682, 0
    %v718 = vsel %vm117, %v683, 0
    %v721 = vsel %vm117, %v684, 0
    %v724 = vsel %vm117, %v685, 0
    %v727 = vsel %vm117, %v686, 0
    %v730 = vsel %vm117, %v687, 0
    %v733 = vsel %vm117, %v688, 0
    %v736 = vsel %vm117, %v689, 0
    %738 = vmatpush.bf16.msra.mxu0 0
    %739 = vmatpush.bf16.msra.mxu0 0
    %740 = vmatpush.bf16.msra.mxu0 0
    %741 = vmatpush.bf16.msra.mxu0 0
    %742 = vmatpush.bf16.msra.mxu0 %v709
    %743 = vmatpush.bf16.msra.mxu0 %v708
    %744 = vmatpush.bf16.msra.mxu0 %v707
    %745 = vmatpush.bf16.msra.mxu0 %v706
    %746 = vmatmul.bf16.gmra.mxu0 %v715
    %v747 = vpop.f32.mrf.mxu0
    %v748 = vadd.f32 0.0, %v747
    %v749 = vpop.f32.mrf.mxu0
    %v750 = vadd.f32 0.0, %v749
    %751 = vmatmul.bf16.gmra.mxu0 %v718
    %v752 = vpop.f32.mrf.mxu0
    %v753 = vadd.f32 0.0, %v752
    %v754 = vpop.f32.mrf.mxu0
    %v755 = vadd.f32 0.0, %v754
    %756 = vmatmul.bf16.gmra.mxu0 %v721
    %v757 = vpop.f32.mrf.mxu0
    %v758 = vadd.f32 0.0, %v757
    %v759 = vpop.f32.mrf.mxu0
    %v760 = vadd.f32 0.0, %v759
    %761 = vmatmul.bf16.gmra.mxu0 %v724
    %v762 = vpop.f32.mrf.mxu0
    %v763 = vadd.f32 0.0, %v762
    %v764 = vpop.f32.mrf.mxu0
    %v765 = vadd.f32 0.0, %v764
    %766 = vmatmul.bf16.gmra.mxu0 %v727
    %v767 = vpop.f32.mrf.mxu0
    %v768 = vadd.f32 0.0, %v767
    %v769 = vpop.f32.mrf.mxu0
    %v770 = vadd.f32 0.0, %v769
    %771 = vmatmul.bf16.gmra.mxu0 %v730
    %v772 = vpop.f32.mrf.mxu0
    %v773 = vadd.f32 0.0, %v772
    %v774 = vpop.f32.mrf.mxu0
    %v775 = vadd.f32 0.0, %v774
    %776 = vmatmul.bf16.gmra.mxu0 %v733
    %v777 = vpop.f32.mrf.mxu0
    %v778 = vadd.f32 0.0, %v777
    %v779 = vpop.f32.mrf.mxu0
    %v780 = vadd.f32 0.0, %v779
    %781 = vmatmul.bf16.gmra.mxu0 %v736
    %v782 = vpop.f32.mrf.mxu0
    %v783 = vadd.f32 0.0, %v782
    %v784 = vpop.f32.mrf.mxu0
    %v785 = vadd.f32 0.0, %v784
    %786 = vdwg.mxu0
    %v787 = vadd.f32 %v610, %v748
    %v788 = vadd.f32 %v611, %v750
    %v789 = vadd.f32 %v612, %v753
    %v790 = vadd.f32 %v613, %v755
    %v791 = vadd.f32 %v614, %v758
    %v792 = vadd.f32 %v615, %v760
    %v793 = vadd.f32 %v616, %v763
    %v794 = vadd.f32 %v617, %v765
    %v795 = vadd.f32 %v618, %v768
    %v796 = vadd.f32 %v619, %v770
    %v797 = vadd.f32 %v620, %v773
    %v798 = vadd.f32 %v621, %v775
    %v799 = vadd.f32 %v622, %v778
    %v800 = vadd.f32 %v623, %v780
    %v801 = vadd.f32 %v624, %v783
    %v802 = vadd.f32 %v625, %v785
    %v803 = vmax.f32 %v787, 0.0
    %v804 = vmax.f32 %v788, 0.0
    %v805 = vmax.f32 %v789, 0.0
    %v806 = vmax.f32 %v790, 0.0
    %v807 = vmax.f32 %v791, 0.0
    %v808 = vmax.f32 %v792, 0.0
    %v809 = vmax.f32 %v793, 0.0
    %v810 = vmax.f32 %v794, 0.0
    %v811 = vmax.f32 %v795, 0.0
    %v812 = vmax.f32 %v796, 0.0
    %v813 = vmax.f32 %v797, 0.0
    %v814 = vmax.f32 %v798, 0.0
    %v815 = vmax.f32 %v799, 0.0
    %v816 = vmax.f32 %v800, 0.0
    %v817 = vmax.f32 %v801, 0.0
    %v818 = vmax.f32 %v802, 0.0
    %v819 = vmax.f32 %v803, %v805
    %v820 = vmax.f32 %v804, %v806
    %v821 = vmax.f32 %v819, %v807
    %v822 = vmax.f32 %v820, %v808
    %v823 = vmax.f32 %v821, %v809
    %v824 = vmax.f32 %v822, %v810
    %v825 = vmax.f32 %v823, %v811
    %v826 = vmax.f32 %v824, %v812
    %v827 = vmax.f32 %v825, %v813
    %v828 = vmax.f32 %v826, %v814
    %v829 = vmax.f32 %v827, %v815
    %v830 = vmax.f32 %v828, %v816
    %v831 = vmax.f32 %v829, %v817
    %v832 = vmax.f32 %v830, %v818
    %v833 = vld [vmem:[%s2] sm:$0xff]
    %v834 = vld [vmem:[%s2 + $0x8] sm:$0xff]
    %v835 = vld [vmem:[%s2 + $0x10] sm:$0xff]
    %v836 = vld [vmem:[%s2 + $0x18] sm:$0xff]
    %v837 = vld [vmem:[%s3] sm:$0x1]
    %v839 = vperm.slane %v837, 0
    %vm841 = vcmask 261120
    %v843 = vsel %vm841, %v831, 0
    %v846 = vsel %vm841, %v832, 0
    %848 = vmatpush.msra.mxu0 0.0
    %849 = vmatpush.msra.mxu0 0.0
    %850 = vmatpush.msra.mxu0 0.0
    %851 = vmatpush.msra.mxu0 0.0
    %852 = vmatpush.msra.mxu0 0.0
    %853 = vmatpush.msra.mxu0 0.0
    %854 = vmatpush.msra.mxu0 0.0
    %855 = vmatpush.msra.mxu0 0.0
    %856 = vmatpush.msra.mxu0 0.0
    %857 = vmatpush.msra.mxu0 0.0
    %858 = vmatpush.msra.mxu0 0.0
    %859 = vmatpush.msra.mxu0 0.0
    %860 = vmatpush.msra.mxu0 %v836
    %861 = vmatpush.msra.mxu0 %v835
    %862 = vmatpush.msra.mxu0 %v834
    %863 = vmatpush.msra.mxu0 %v833
    %864 = vmatmul.f32.gmra.mxu0 %v843
    %v865 = vpop.f32.mrf.mxu0
    %v866 = vadd.f32 %v839, %v865
    %867 = vmatmul.f32.gmra.mxu0 %v846
    %v868 = vpop.f32.mrf.mxu0
    %v869 = vadd.f32 %v839, %v868
    %870 = vdwg.mxu0
    %871 = vst [vmem:[#allocation2] sm:$0xff] %v866
    %872 = vst [vmem:[#allocation2 + $0x8] sm:$0xff] %v869
    // Predicated region
    $region18: #{tpu_custom_call.1} parent=1 // pred_check
      _
    $region19: #{tpu_custom_call.1} parent=1 // pred_check_branch
      %874 = sbr.rel (0) target = $region21
    $region20: #{tpu_custom_call.1} parent=1 // pred_region
      %876 = vsyncadd [#allocation3], 0
      %s877 = sshll.u32 [#allocation2], 4
      %s878 = int_to_ptr.vmem [resolvable:$true] %s877
      %s879 = sshll.u32 %s4, 4
      %s880 = int_to_ptr.hbm [resolvable:$true] %s879
      %885 = dma.vmem_to_hbm [thread:$0]  %s878, 256, %s880, [#allocation3], 128, 128, 8
    $region21: #{tpu_custom_call.1} parent=1 // pred_fallthru
      _
    // Predicated region
    $region22: #{tpu_custom_call.1} parent=1 // pred_check
      _
    $region23: #{tpu_custom_call.1} parent=1 // pred_check_branch
      %887 = sbr.rel (0) target = $region25
    $region24: #{tpu_custom_call.1} parent=1 // pred_region
      %889 = dma.done [#allocation3], 256
    $region25: #{tpu_custom_call.1} parent=1 // pred_fallthru
      _
    %890 = vsyncpa [#allocation3], 1

</llo_original>
